<compile_context>
chip_gen: v7x
topology: tpu7x:2x2x1
jax: 0.10.0
libtpu: 0.0.40
codegen_flags: <defaults>
</compile_context>

<pallas_src>
import functools

import jax
import jax.numpy as jnp
from jax.experimental import pallas as pl
from jax.experimental.pallas import tpu as pltpu


def _round_up(x, m):
    return ((x + m - 1) // m) * m


def _zero_shot_matmul_kernel(x_ref, w_ref, o_ref):
    # One (tm, tn) output tile; full-K contraction in a single MXU pass.
    # Operands stay in their native dtype (f32 or bf16); accumulation is f32,
    # matching the PyTorch .float() matmul contract.
    o_ref[...] = jnp.dot(x_ref[...], w_ref[...],
                         preferred_element_type=jnp.float32)


# ----------------------------------------------------------------------------
# Static tile policy
#   M (batch):   B <= 512 -> whole batch is one block (weights streamed once);
#                otherwise tile at 256, padding B rows only (x is cheap).
#   N (classes): always a multiple of 128 (lane-dense stores).
#                Cp <= 128          -> single 128-wide block
#                128 < Cp <= 2048   -> split into 2 blocks (both v7x TCs busy)
#                Cp  > 2048         -> 1024-wide blocks (amortize step overhead)
# ----------------------------------------------------------------------------
_M_FULL_MAX = 512
_M_TILE = 256
_N_SPLIT_MAX = 2048
_N_TILE_LARGE = 1024


def _n_tiling(C):
    """Return (tn, Cp): lane-dense N tile width and padded class count."""
    Cp0 = _round_up(max(int(C), 1), 128)
    if Cp0 <= 128:
        return Cp0, Cp0
    if Cp0 <= _N_SPLIT_MAX:
        tn = _round_up(pl.cdiv(Cp0, 2), 128)      # two blocks -> megacore-shardable
        return tn, 2 * tn
    return _N_TILE_LARGE, _round_up(Cp0, _N_TILE_LARGE)


@functools.partial(jax.jit, static_argnames=("tn", "num_classes", "trim"))
def _zero_shot_forward(x1, w_padded, *, tn, num_classes, trim):
    B, D = x1.shape
    Dw, Cp = w_padded.shape
    assert D == Dw, "embedding dims must match"
    assert Cp % tn == 0

    # --- M (batch) tiling ---
    if B <= _M_FULL_MAX:
        tm, Bp = B, B                                  # full-batch block, no pad
    else:
        tm = _M_TILE
        Bp = _round_up(B, tm)
    x_p = x1 if Bp == B else jnp.pad(x1, ((0, Bp - B), (0, 0)))

    n_blocks = Cp // tn
    m_blocks = Bp // tm
    # N outermost: the W block index only changes on the outer axis, so each
    # (D, tn) weight block is fetched from HBM exactly once; only the small x
    # tiles are re-read per N block.
    grid = (n_blocks, m_blocks)

    x_item = jnp.dtype(x_p.dtype).itemsize
    w_item = jnp.dtype(w_padded.dtype).itemsize
    # Per-step working set, double-buffered, plus headroom.
    step_bytes = tm * D * x_item + D * tn * w_item + tm * tn * 4
    vmem_limit = int(min(max(2 * step_bytes + (2 << 20), 8 << 20), 48 << 20))

    cost = pl.CostEstimate(
        flops=2 * Bp * D * Cp,
        transcendentals=0,
        bytes_accessed=(Bp * D * x_item * n_blocks   # x re-read once per N block
                        + D * Cp * w_item            # W streamed exactly once
                        + Bp * Cp * 4),              # f32 logits written
    )

    out_p = pl.pallas_call(
        _zero_shot_matmul_kernel,
        out_shape=jax.ShapeDtypeStruct((Bp, Cp), jnp.float32),
        grid_spec=pltpu.PrefetchScalarGridSpec(
            num_scalar_prefetch=0,
            grid=grid,
            in_specs=[
                pl.BlockSpec((tm, D), lambda j, i: (i, 0)),   # image features
                pl.BlockSpec((D, tn), lambda j, i: (0, j)),   # text embeddings
            ],
            out_specs=pl.BlockSpec((tm, tn), lambda j, i: (i, j)),
        ),
        compiler_params=pltpu.CompilerParams(
            dimension_semantics=("parallel", "parallel"),
            vmem_limit_bytes=vmem_limit,
        ),
        cost_estimate=cost,
    )(x_p, w_padded)

    if Bp != B:
        out_p = out_p[:B]
    if trim and Cp != num_classes:
        # Exact PyTorch contract: (B, C) logits.  For max throughput callers
        # can pass trim=False and mask the zero tail columns instead.
        out_p = out_p[:, :num_classes]
    return out_p


class ClipZeroShotAdapt:
    """JAX/Pallas analog of CLIP_Zero_Shot_adapt (forward pass only).

    The text-embedding matrix is a module constant, so it is padded to a
    lane-dense class width (multiple of 128) exactly once here at init; the
    forward pass never pays a per-call pad/copy of the weights.
    """

    def __init__(self, text_embeddings_for_zero_shot):
        w = jnp.asarray(text_embeddings_for_zero_shot)
        assert w.ndim == 2, "expected (D, C) text-embedding matrix"
        D, C = w.shape
        self.num_classes = int(C)
        tn, Cp = _n_tiling(C)
        self.tn = int(tn)
        if Cp != C:
            w = jnp.pad(w, ((0, 0), (0, Cp - C)))     # one-time, init cost only
        # Keep native dtype: bf16 weights stream half the HBM bytes and the MXU
        # still accumulates in f32.  Exotic dtypes fall back to f32.
        if w.dtype not in (jnp.float32, jnp.bfloat16):
            w = w.astype(jnp.float32)
        self.w_padded = w

    def __call__(self, x1, *, trim=True):
        if x1.dtype not in (jnp.float32, jnp.bfloat16):
            x1 = x1.astype(jnp.float32)
        return _zero_shot_forward(
            x1, self.w_padded, tn=self.tn,
            num_classes=self.num_classes, trim=trim)


def _l2_normalize(x, axis=-1, eps=1e-12):
    n = jnp.sqrt(jnp.sum(x * x, axis=axis, keepdims=True))
    return x / jnp.maximum(n, eps)


if __name__ == "__main__":
    key = jax.random.PRNGKey(0)
    k_img, k_txt, k_img2, k_txt2 = jax.random.split(key, 4)

    # --- Test 1: tiny module-consistent shapes (B=8, D=256, C=10) -------------
    B, D, C = 8, 256, 10
    x1 = _l2_normalize(jax.random.normal(k_img, (B, D), dtype=jnp.float32), axis=-1)
    # text_embeddings_for_zero_shot: per-class L2-normalized embeddings stacked
    # along dim=1 -> (D, C).  Synthetic & deterministic (no checkpoint load).
    # TODO(synk): CLIP text/image encoders (encode_text/encode_image,
    # tokenization, prompt templating) are out of scope; only the forward()
    # matmul over precomputed embeddings is implemented in Pallas.
    class_emb = _l2_normalize(
        jax.random.normal(k_txt, (C, D), dtype=jnp.float32), axis=-1)
    text_embeddings_for_zero_shot = class_emb.T            # (D, C)

    module = ClipZeroShotAdapt(text_embeddings_for_zero_shot)
    out = jax.block_until_ready(module(x1))

    ref = x1.astype(jnp.float32) @ text_embeddings_for_zero_shot.astype(jnp.float32)
    assert out.shape == (B, C)
    assert jnp.allclose(out, ref, atol=1e-5, rtol=1e-5)

    # --- Test 2: exercises the padded / 2-block N path (B=16, D=128, C=200) ---
    B2, D2, C2 = 16, 128, 200
    x2 = _l2_normalize(jax.random.normal(k_img2, (B2, D2), dtype=jnp.float32), axis=-1)
    w2 = _l2_normalize(jax.random.normal(k_txt2, (C2, D2), dtype=jnp.float32), axis=-1).T
    module2 = ClipZeroShotAdapt(w2)
    out2 = jax.block_until_ready(module2(x2))
    ref2 = x2 @ w2
    assert out2.shape == (B2, C2)
    assert jnp.allclose(out2, ref2, atol=1e-5, rtol=1e-5)

    print("KERNEL_OK")
</pallas_src>

<mosaic_0001>
module attributes {stable_mosaic.version = 11 : i64} {
  func.func @_zero_shot_matmul_kernel(%arg0: i32, %arg1: i32, %arg2: memref<8x256xf32, #tpu.memory_space<vmem>>, %arg3: memref<256x128xf32, #tpu.memory_space<vmem>>, %arg4: memref<8x128xf32, #tpu.memory_space<vmem>>) attributes {dimension_semantics = [#tpu.dimension_semantics<parallel>, #tpu.dimension_semantics<parallel>], iteration_bounds = array<i64: 1, 1>, scalar_prefetch = 0 : i64, scratch_operands = 0 : i64, tpu.core_type = #tpu.core_type<tc>, window_params = [{transform_indices = @transform_0, window_bounds = array<i64: 8, 256>}, {transform_indices = @transform_1, window_bounds = array<i64: 256, 128>}, {transform_indices = @transform_2, window_bounds = array<i64: 8, 128>}]} {
    %c0 = arith.constant 0 : index
    %c0_0 = arith.constant 0 : index
    %0 = vector.load %arg2[%c0, %c0_0] : memref<8x256xf32, #tpu.memory_space<vmem>>, vector<8x256xf32>
    %c0_1 = arith.constant 0 : index
    %c0_2 = arith.constant 0 : index
    %1 = vector.load %arg3[%c0_1, %c0_2] : memref<256x128xf32, #tpu.memory_space<vmem>>, vector<256x128xf32>
    %cst = arith.constant dense<0.000000e+00> : vector<8x128xf32>
    %2 = tpu.matmul %0, %1, %cst {dimension_numbers = #tpu.dot_dimension_numbers<[1], [0], [0], [1], [0, 0, 1, 1], [], []>} : vector<8x256xf32>, vector<256x128xf32>, vector<8x128xf32> -> vector<8x128xf32>
    %c0_3 = arith.constant 0 : index
    %c0_4 = arith.constant 0 : index
    %3 = vector.load %arg4[%c0_3, %c0_4] : memref<8x128xf32, #tpu.memory_space<vmem>>, vector<8x128xf32>
    tpu.vector_store %arg4[%c0_3, %c0_4], %2 {strides = array<i32>} : memref<8x128xf32, #tpu.memory_space<vmem>>, vector<8x128xf32>,
    return
  }
  func.func @transform_0(%arg0: i32, %arg1: i32) -> (i32, i32) {
    %c0_i32 = arith.constant 0 : i32
    %c0_i32_0 = arith.constant 0 : i32
    return %arg1, %c0_i32 : i32, i32
  }
  func.func @transform_1(%arg0: i32, %arg1: i32) -> (i32, i32) {
    %c0_i32 = arith.constant 0 : i32
    %c0_i32_0 = arith.constant 0 : i32
    return %c0_i32, %arg0 : i32, i32
  }
  func.func @transform_2(%arg0: i32, %arg1: i32) -> (i32, i32) {
    %c0_i32 = arith.constant 0 : i32
    return %arg1, %arg0 : i32, i32
  }
}

</mosaic_0001>

<llo_original>
// kernel: _zero_shot_forward.1
$region0: #{_zero_shot_forward.1}
  #allocation0 [shape = 'u32[]', space=smem, size = 0x4, offset = 0x4, fixed_abs, tag = 'smem constant byte address 0x4 - core index']
  #allocation1 [shape = 'u32[144,128]{1,0:T(1,128)}', space=vmem, size = 0x12000, scoped, tag = 'internal scratch']
  %s0 = inlined_call_operand.hbm [shape: f32[8,256], index: 0, kind: input, shape index: {}]
  %s1 = inlined_call_operand.hbm [shape: f32[256,128], index: 1, kind: input, shape index: {}]
  %s2 = inlined_call_operand.hbm [shape: f32[8,128], index: 2, kind: output, shape index: {}]
  %s3 = sld [smem:[#allocation0]]
  $region26: #{_zero_shot_forward.1} parent=0
    _
  %s5 = ssub.s32 1, %s3
  %s6 = scalar_select 0, %s5, %s3
  $region1: #{_zero_shot_forward.1} parent=0
    #allocation2 [shape = 'u8[8192]{0}', space=vmem, size = 0x2000, scoped, tag = 'input window, operand 0, single buffered']
    #allocation3 [shape = 's32[1]{0}', space=sflag, size = 0x4, scoped, tag = 'scoped memory for _zero_shot_forward.1']
    #allocation4 [shape = 's32[1]{0}', space=sflag, size = 0x4, scoped, tag = 'scoped memory for _zero_shot_forward.1']
    #allocation5 [shape = 'u8[131072]{0}', space=vmem, size = 0x20000, scoped, tag = 'input window, operand 1, single buffered']
    #allocation6 [shape = 's32[1]{0}', space=sflag, size = 0x4, scoped, tag = 'scoped memory for _zero_shot_forward.1']
    #allocation7 [shape = 'u8[4096]{0}', space=vmem, size = 0x1000, scoped, tag = 'output window, operand 0, single buffered']
    %7 = vsyncpa [#allocation3], 0
    %8 = vsyncpa [#allocation6], 0
    %9 = vsyncpa [#allocation4], 0
    // Predicated region
    $region2: #{_zero_shot_forward.1} parent=1 // pred_check
      _
    $region3: #{_zero_shot_forward.1} parent=1 // pred_check_branch
      %11 = sbr.rel (0) target = $region5
    $region4: #{_zero_shot_forward.1} parent=1 // pred_region
      %s13 = ssub.s32 256, 256
      %14 = vsyncadd [#allocation3], %s13
      %s16 = sshll.u32 [#allocation2], 4
      %s17 = int_to_ptr.vmem [resolvable:$true] %s16
      %19 = dma.hbm_to_vmem [thread:$0]  %s0, 256, %s17, [#allocation3]
    $region5: #{_zero_shot_forward.1} parent=1 // pred_fallthru
      _
    // Predicated region
    $region6: #{_zero_shot_forward.1} parent=1 // pred_check
      _
    $region7: #{_zero_shot_forward.1} parent=1 // pred_check_branch
      %21 = sbr.rel (0) target = $region9
    $region8: #{_zero_shot_forward.1} parent=1 // pred_region
      %s23 = ssub.s32 4096, 4096
      %24 = vsyncadd [#allocation6], %s23
      %s25 = sshll.u32 [#allocation5], 4
      %s26 = int_to_ptr.vmem [resolvable:$true] %s25
      %31 = dma.hbm_to_vmem [thread:$0]  %s1, 4096, %s26, [#allocation6], 128, 128, 8
    $region9: #{_zero_shot_forward.1} parent=1 // pred_fallthru
      _
    // Predicated region
    $region10: #{_zero_shot_forward.1} parent=1 // pred_check
      _
    $region11: #{_zero_shot_forward.1} parent=1 // pred_check_branch
      %33 = sbr.rel (0) target = $region13
    $region12: #{_zero_shot_forward.1} parent=1 // pred_region
      %34 = dma.done [#allocation3], 256
    $region13: #{_zero_shot_forward.1} parent=1 // pred_fallthru
      _
    // Predicated region
    $region14: #{_zero_shot_forward.1} parent=1 // pred_check
      _
    $region15: #{_zero_shot_forward.1} parent=1 // pred_check_branch
      %36 = sbr.rel (0) target = $region17
    $region16: #{_zero_shot_forward.1} parent=1 // pred_region
      %37 = dma.done [#allocation6], 4096
    $region17: #{_zero_shot_forward.1} parent=1 // pred_fallthru
      _
    %v38 = vld [vmem:[#allocation2] sm:$0xff]
    %v39 = vld [vmem:[#allocation2 + $0x8] sm:$0xff]
    %v40 = vld [vmem:[#allocation5] sm:$0xff]
    %v41 = vld [vmem:[#allocation5 + $0x8] sm:$0xff]
    %v42 = vld [vmem:[#allocation5 + $0x10] sm:$0xff]
    %v43 = vld [vmem:[#allocation5 + $0x18] sm:$0xff]
    %v44 = vld [vmem:[#allocation5 + $0x20] sm:$0xff]
    %v45 = vld [vmem:[#allocation5 + $0x28] sm:$0xff]
    %v46 = vld [vmem:[#allocation5 + $0x30] sm:$0xff]
    %v47 = vld [vmem:[#allocation5 + $0x38] sm:$0xff]
    %v48 = vld [vmem:[#allocation5 + $0x40] sm:$0xff]
    %v49 = vld [vmem:[#allocation5 + $0x48] sm:$0xff]
    %v50 = vld [vmem:[#allocation5 + $0x50] sm:$0xff]
    %v51 = vld [vmem:[#allocation5 + $0x58] sm:$0xff]
    %v52 = vld [vmem:[#allocation5 + $0x60] sm:$0xff]
    %v53 = vld [vmem:[#allocation5 + $0x68] sm:$0xff]
    %v54 = vld [vmem:[#allocation5 + $0x70] sm:$0xff]
    %v55 = vld [vmem:[#allocation5 + $0x78] sm:$0xff]
    %v56 = vld [vmem:[#allocation5 + $0x80] sm:$0xff]
    %v57 = vld [vmem:[#allocation5 + $0x88] sm:$0xff]
    %v58 = vld [vmem:[#allocation5 + $0x90] sm:$0xff]
    %v59 = vld [vmem:[#allocation5 + $0x98] sm:$0xff]
    %v60 = vld [vmem:[#allocation5 + $0xa0] sm:$0xff]
    %v61 = vld [vmem:[#allocation5 + $0xa8] sm:$0xff]
    %v62 = vld [vmem:[#allocation5 + $0xb0] sm:$0xff]
    %v63 = vld [vmem:[#allocation5 + $0xb8] sm:$0xff]
    %v64 = vld [vmem:[#allocation5 + $0xc0] sm:$0xff]
    %v65 = vld [vmem:[#allocation5 + $0xc8] sm:$0xff]
    %v66 = vld [vmem:[#allocation5 + $0xd0] sm:$0xff]
    %v67 = vld [vmem:[#allocation5 + $0xd8] sm:$0xff]
    %v68 = vld [vmem:[#allocation5 + $0xe0] sm:$0xff]
    %v69 = vld [vmem:[#allocation5 + $0xe8] sm:$0xff]
    %v70 = vld [vmem:[#allocation5 + $0xf0] sm:$0xff]
    %v71 = vld [vmem:[#allocation5 + $0xf8] sm:$0xff]
    %72 = vmatprep.subr.mxu0 0.0
    %73 = vmatpush1.msra.mxu0 %v40
    %74 = vmatprep.subr.mxu0 0.0
    %75 = vmatpush1.msra.mxu0 %v41
    %76 = vmatprep.subr.mxu0 0.0
    %77 = vmatpush1.msra.mxu0 %v42
    %78 = vmatprep.subr.mxu0 0.0
    %79 = vmatpush1.msra.mxu0 %v43
    %80 = vmatprep.subr.mxu0 0.0
    %81 = vmatpush1.msra.mxu0 %v44
    %82 = vmatprep.subr.mxu0 0.0
    %83 = vmatpush1.msra.mxu0 %v45
    %84 = vmatprep.subr.mxu0 0.0
    %85 = vmatpush1.msra.mxu0 %v46
    %86 = vmatprep.subr.mxu0 0.0
    %87 = vmatpush1.msra.mxu0 %v47
    %88 = vmatprep.subr.mxu0 0.0
    %89 = vmatpush1.msra.mxu0 %v48
    %90 = vmatprep.subr.mxu0 0.0
    %91 = vmatpush1.msra.mxu0 %v49
    %92 = vmatprep.subr.mxu0 0.0
    %93 = vmatpush1.msra.mxu0 %v50
    %94 = vmatprep.subr.mxu0 0.0
    %95 = vmatpush1.msra.mxu0 %v51
    %96 = vmatprep.subr.mxu0 0.0
    %97 = vmatpush1.msra.mxu0 %v52
    %98 = vmatprep.subr.mxu0 0.0
    %99 = vmatpush1.msra.mxu0 %v53
    %100 = vmatprep.subr.mxu0 0.0
    %101 = vmatpush1.msra.mxu0 %v54
    %102 = vmatprep.subr.mxu0 0.0
    %103 = vmatpush1.msra.mxu0 %v55
    %104 = vmatprep.subr.mxu0 0.0
    %105 = vmatpush1.msra.mxu0 %v56
    %106 = vmatprep.subr.mxu0 0.0
    %107 = vmatpush1.msra.mxu0 %v57
    %108 = vmatprep.subr.mxu0 0.0
    %109 = vmatpush1.msra.mxu0 %v58
    %110 = vmatprep.subr.mxu0 0.0
    %111 = vmatpush1.msra.mxu0 %v59
    %112 = vmatprep.subr.mxu0 0.0
    %113 = vmatpush1.msra.mxu0 %v60
    %114 = vmatprep.subr.mxu0 0.0
    %115 = vmatpush1.msra.mxu0 %v61
    %116 = vmatprep.subr.mxu0 0.0
    %117 = vmatpush1.msra.mxu0 %v62
    %118 = vmatprep.subr.mxu0 0.0
    %119 = vmatpush1.msra.mxu0 %v63
    %120 = vmatprep.subr.mxu0 0.0
    %121 = vmatpush1.msra.mxu0 %v64
    %122 = vmatprep.subr.mxu0 0.0
    %123 = vmatpush1.msra.mxu0 %v65
    %124 = vmatprep.subr.mxu0 0.0
    %125 = vmatpush1.msra.mxu0 %v66
    %126 = vmatprep.subr.mxu0 0.0
    %127 = vmatpush1.msra.mxu0 %v67
    %128 = vmatprep.subr.mxu0 0.0
    %129 = vmatpush1.msra.mxu0 %v68
    %130 = vmatprep.subr.mxu0 0.0
    %131 = vmatpush1.msra.mxu0 %v69
    %132 = vmatprep.subr.mxu0 0.0
    %133 = vmatpush1.msra.mxu0 %v70
    %134 = vmatprep.subr.mxu0 0.0
    %135 = vmatpush1.msra.mxu0 %v71
    %136 = vmatprep.mubr.f32.mxu0 %v39
    %137 = vmatmul.mubr.f32.gmra.mrb[0].mxu0 %v38
    %v138 = vpop.f32.mrb[0].mxu0
    %v139 = vadd.f32 0.0, %v138
    %v140 = vpop.f32.mrb[0].mxu0
    %141 = vdwg.mxu0
    %142 = vst [vmem:[#allocation7] sm:$0xff] %v139
    // Predicated region
    $region18: #{_zero_shot_forward.1} parent=1 // pred_check
      _
    $region19: #{_zero_shot_forward.1} parent=1 // pred_check_branch
      %144 = sbr.rel (0) target = $region21
    $region20: #{_zero_shot_forward.1} parent=1 // pred_region
      %s146 = ssub.s32 128, 128
      %147 = vsyncadd [#allocation4], %s146
      %s149 = sshll.u32 [#allocation7], 4
      %s150 = int_to_ptr.vmem [resolvable:$true] %s149
      %152 = dma.vmem_to_hbm [thread:$0]  %s150, 128, %s2, [#allocation4]
    $region21: #{_zero_shot_forward.1} parent=1 // pred_fallthru
      _
    // Predicated region
    $region22: #{_zero_shot_forward.1} parent=1 // pred_check
      _
    $region23: #{_zero_shot_forward.1} parent=1 // pred_check_branch
      %154 = sbr.rel (0) target = $region25
    $region24: #{_zero_shot_forward.1} parent=1 // pred_region
      %155 = dma.done [#allocation4], 128
    $region25: #{_zero_shot_forward.1} parent=1 // pred_fallthru
      _
    %156 = vsyncpa [#allocation3], 1
    %157 = vsyncpa [#allocation6], 1
    %158 = vsyncpa [#allocation4], 1

</llo_original>
